<compile_context>
chip_gen: v6e
topology: v6e:2x2x1
jax: 0.10.0
libtpu: 0.0.40
codegen_flags: <defaults>
</compile_context>

<pallas_src>
import functools

import jax
import jax.numpy as jnp
import numpy as np
from jax import lax
from jax.experimental import pallas as pl
from jax.experimental.pallas import tpu as pltpu


_ONEHOT_MAX_ROWS = 512   # above this the one-hot MXU waste dominates -> DMA path
_R_CHUNK = 512           # in-kernel K-chunk for the one-hot matmul
_DMA_SLOTS = 8           # outstanding per-row copies in the DMA gather


def _round_up(x, m):
    return (x + m - 1) // m * m


def _vmem_limit(budget_bytes):
    """vmem_limit_bytes: 2x the static budget, floored at 8 MiB, capped at
    ~75% of the chip's per-core VMEM (48 MiB fallback -- safe on v7x)."""
    try:
        cap = int(0.75 * pltpu.get_tpu_info().vmem_capacity_bytes)
    except Exception:
        cap = 48 * 2 ** 20
    return int(min(max(2 * budget_bytes, 8 * 2 ** 20), cap))


def _pick_block_rows(n, block_rows, itemsize):
    """Rows per grid step: big enough to amortize the ~0.35us/step fixed cost,
    small enough that the grid has >=2 steps (v7x has 2 TensorCores), rounded
    to the sublane packing of the table dtype (8 for f32, 16 for bf16)."""
    sub = 8 if itemsize >= 4 else 16
    t = min(block_rows, max(-(-n // 2), sub))     # cdiv(n, 2), at least 1 tile
    return _round_up(t, sub)


# ------------------------------------------------------------------ one-hot --
def _onehot_gather_kernel(idx_ref, table_ref, o_ref, *, n_chunks, chunk):
    # idx_ref:   (T, 1)      int32 row ids for this block of output rows
    # table_ref: (R_pad, D)  combined embedding table, VMEM resident
    # o_ref:     (T, D)      gathered rows (lane-dense store)
    T, D = o_ref.shape
    idx = idx_ref[...]                                               # (T, 1)

    def body(c, acc):
        start = pl.multiple_of(c * chunk, chunk)
        tbl = table_ref[pl.ds(start, chunk), :]                      # (chunk, D)
        lanes = jax.lax.broadcasted_iota(jnp.int32, (T, chunk), 1) + start
        onehot = (lanes == idx).astype(tbl.dtype)                    # (T, chunk)
        # precision=HIGHEST: keep the 1.0 * x gather bit-exact for f32 tables.
        return acc + jnp.dot(onehot, tbl,
                             preferred_element_type=jnp.float32,
                             precision=jax.lax.Precision.HIGHEST)

    acc = lax.fori_loop(0, n_chunks, body,
                        jnp.zeros((T, D), jnp.float32), unroll=True)
    o_ref[...] = acc.astype(o_ref.dtype)


def _gather_onehot_call(idx, table, n_pad, T):
    rows, D = table.shape
    itemsize = jnp.dtype(table.dtype).itemsize

    # Pad table rows: lane-aligned to 128, and (when chunking) to a multiple
    # of the K-chunk so every fori_loop slice is full size.
    R_pad = _round_up(rows, 128)
    chunk = min(_R_CHUNK, R_pad)
    R_pad = _round_up(R_pad, chunk)
    if R_pad != rows:
        table = jnp.concatenate(
            [table, jnp.zeros((R_pad - rows, D), table.dtype)], axis=0)
    n_chunks = R_pad // chunk

    idx2 = idx.reshape(n_pad, 1)

    # Honest VMEM budget.  The table BlockSpec has a constant index_map so it
    # is only DMA'd once, but Pallas still allocates the default two pipeline
    # buffers; at <=_ONEHOT_MAX_ROWS rows that is well under 1 MiB, so we
    # budget for 2x instead of forcing single-buffering.  Large tables never
    # reach this path (they use the DMA gather).
    budget = (2 * R_pad * D * itemsize     # resident table (2 buffers)
              + 2 * T * D * itemsize       # output blocks (double-buffered)
              + 2 * T * 4                  # index blocks
              + T * chunk * 4              # one-hot chunk temporary (f32)
              + T * D * 4)                 # f32 accumulator

    kernel = functools.partial(_onehot_gather_kernel,
                               n_chunks=n_chunks, chunk=chunk)
    return pl.pallas_call(
        kernel,
        out_shape=jax.ShapeDtypeStruct((n_pad, D), table.dtype),
        grid=(n_pad // T,),
        in_specs=[
            pl.BlockSpec((T, 1), lambda i: (i, 0)),       # index block
            pl.BlockSpec((R_pad, D), lambda i: (0, 0)),   # table, fetched once
        ],
        out_specs=pl.BlockSpec((T, D), lambda i: (i, 0)),  # lane-dense output
        compiler_params=pltpu.CompilerParams(
            dimension_semantics=("parallel",),
            vmem_limit_bytes=_vmem_limit(budget)),
    )(idx2, table)


# ---------------------------------------------------------------- DMA gather --
def _dma_gather_kernel(idx_ref, table_hbm, o_ref, sem):
    # idx_ref:   (n_pad,)  int32 flat row ids, scalar-prefetched into SMEM
    # table_hbm: (rows, D) embedding table left in HBM (memory_space=pl.ANY)
    # o_ref:     (T, D)    output block in VMEM; rows written directly by DMA
    # sem:       (_DMA_SLOTS,) DMA semaphores -> up to _DMA_SLOTS copies in flight
    T = o_ref.shape[0]
    base = pl.program_id(0) * T

    def _shape_desc(slot):
        # Descriptor used only for .wait(): the semaphore plus a matching
        # (1, D) transfer shape is all that matters.
        return pltpu.make_async_copy(
            table_hbm.at[pl.ds(0, 1), :], o_ref.at[pl.ds(0, 1), :], sem.at[slot])

    @pl.loop(0, T)
    def _(r):
        slot = r & (_DMA_SLOTS - 1)

        @pl.when(r >= _DMA_SLOTS)
        def _():
            _shape_desc(slot).wait()      # free the slot we are about to reuse

        row = idx_ref[base + r]
        pltpu.make_async_copy(
            table_hbm.at[pl.ds(row, 1), :],
            o_ref.at[pl.ds(r, 1), :],
            sem.at[slot]).start()

    @pl.loop(0, min(T, _DMA_SLOTS))
    def _(s):
        _shape_desc(s).wait()             # drain remaining in-flight copies


def _gather_dma_call(idx, table, n_pad, T):
    rows, D = table.shape
    itemsize = jnp.dtype(table.dtype).itemsize
    # Only the double-buffered output block lives in VMEM; the table stays in
    # HBM and the indices live in SMEM (scalar prefetch).
    budget = 2 * T * D * itemsize
    return pl.pallas_call(
        _dma_gather_kernel,
        out_shape=jax.ShapeDtypeStruct((n_pad, D), table.dtype),
        grid_spec=pltpu.PrefetchScalarGridSpec(
            num_scalar_prefetch=1,
            grid=(n_pad // T,),
            in_specs=[pl.BlockSpec(memory_space=pl.ANY)],
            out_specs=pl.BlockSpec((T, D), lambda i, idx_ref: (i, 0)),
            scratch_shapes=[pltpu.SemaphoreType.DMA((_DMA_SLOTS,))],
        ),
        compiler_params=pltpu.CompilerParams(
            dimension_semantics=("parallel",),
            vmem_limit_bytes=_vmem_limit(budget)),
    )(idx, table)


# ----------------------------------------------------------------- dispatcher --
def node2vec_gather(flat_idx, table, batch, max_len, d_model,
                    block_rows=512, impl=None):
    """Gather `table[flat_idx]` -> [batch, max_len, d_model].

    flat_idx: int32 [batch*max_len] row ids into `table` ([rows, d_model]).
    impl: None (auto by table size), "onehot" (small resident table, MXU
          one-hot matmul) or "dma" (scalar-prefetch + per-row async-copy
          gather from HBM -- the scalable path for large vocabularies).
    """
    n = batch * max_len
    rows, D = table.shape
    assert D == d_model
    itemsize = jnp.dtype(table.dtype).itemsize

    if impl is None:
        impl = "onehot" if rows <= _ONEHOT_MAX_ROWS else "dma"

    T = _pick_block_rows(n, block_rows, itemsize)
    n_pad = _round_up(n, T)
    # Padded index rows gather table row 0; they are sliced off below.
    idx = jnp.zeros((n_pad,), jnp.int32).at[:n].set(flat_idx.astype(jnp.int32))

    if impl == "onehot":
        out = _gather_onehot_call(idx, table, n_pad, T)
    else:
        out = _gather_dma_call(idx, table, n_pad, T)
    return out[:n].reshape(batch, max_len, D)


def build_indices(node_ids, lengths, num_nodes, max_len):
    """Row ids into the combined table [node rows | cls | sep | pad(zeros)].

    node_ids: int32 [batch, max_len-1], valid where column < lengths[i].
    Returns flat int32 [batch*max_len].
    """
    CLS, SEP, PAD = num_nodes, num_nodes + 1, num_nodes + 2
    batch = node_ids.shape[0]
    p = jnp.arange(max_len)[None, :]             # [1, L] position
    L = lengths[:, None]                         # [B, 1]
    # shift node ids right by one (slot 0 is cls)
    shifted = jnp.concatenate(
        [jnp.zeros((batch, 1), jnp.int32), node_ids], axis=1)[:, :max_len]
    idx = jnp.where(p == 0, CLS,
          jnp.where((p >= 1) & (p <= L), shifted,
          jnp.where((p == L + 1) & (L < max_len - 1), SEP, PAD)))
    return idx.reshape(-1).astype(jnp.int32)


if __name__ == "__main__":
    key = jax.random.PRNGKey(0)
    # d_model=128 keeps the output block a full 128-lane (unmasked) store.
    batch, max_len, d_model, num_nodes = 2, 8, 128, 16

    k1, k2, k3 = jax.random.split(key, 3)
    # graph_model['Node'] embedding table
    node_table = jax.random.normal(k1, (num_nodes, d_model), jnp.float32)
    # nn.Embedding(3, d_model, padding_idx=2): row 2 is zeros
    pre_emb = jax.random.normal(k2, (3, d_model), jnp.float32)
    pre_emb = pre_emb.at[2].set(0.0)

    # TODO(synk): tokenizer.decode is host-side string processing with no
    # Pallas equivalent; the decoded node-id lists are provided as arrays.
    lengths = jnp.array([3, 7], jnp.int32)                 # per-row node count
    node_ids = jax.random.randint(k3, (batch, max_len - 1), 0, num_nodes,
                                  jnp.int32)

    # combined gather table: [node rows | cls | sep | pad(zeros)]
    table = jnp.concatenate([node_table, pre_emb], axis=0)
    flat_idx = build_indices(node_ids, lengths, num_nodes, max_len)
    assert int(jnp.max(flat_idx)) < table.shape[0] and int(jnp.min(flat_idx)) >= 0

    # pure-numpy reference mirroring the PyTorch loop
    ref = np.zeros((batch, max_len, d_model), np.float32)
    nt, pe = np.asarray(node_table), np.asarray(pre_emb)
    nid, Ls = np.asarray(node_ids), np.asarray(lengths)
    for i in range(batch):
        ref[i, 0] = pe[0]                                  # cls
        Li = int(Ls[i])
        ref[i, 1:1 + Li] = nt[nid[i, :Li]]                 # node embeddings
        if Li < max_len - 1:
            ref[i, 1 + Li] = pe[1]                         # sep

    # At n = batch*max_len = 16 the block picker yields T=8 -> a 2-step grid,
    # exercising the multi-step pipeline (and the >=2-step megacore rule).
    # Both gather paths are exercised and checked.
    emb_onehot = node2vec_gather(flat_idx, table, batch, max_len, d_model,
                                 impl="onehot")
    emb_dma = node2vec_gather(flat_idx, table, batch, max_len, d_model,
                              impl="dma")
    emb_onehot, emb_dma = jax.block_until_ready((emb_onehot, emb_dma))

    assert np.allclose(np.asarray(emb_onehot), ref, atol=1e-5), "onehot mismatch"
    assert np.allclose(np.asarray(emb_dma), ref, atol=1e-5), "dma mismatch"
    print("KERNEL_OK")
</pallas_src>

<mosaic_0001>
module attributes {stable_mosaic.version = 11 : i64} {
  func.func @_onehot_gather_kernel(%arg0: i32, %arg1: memref<8x1xi32, #tpu.memory_space<vmem>>, %arg2: memref<128x128xf32, #tpu.memory_space<vmem>>, %arg3: memref<8x128xf32, #tpu.memory_space<vmem>>) attributes {dimension_semantics = [#tpu.dimension_semantics<parallel>], iteration_bounds = array<i64: 2>, scalar_prefetch = 0 : i64, scratch_operands = 0 : i64, tpu.core_type = #tpu.core_type<tc>, window_params = [{transform_indices = @transform_0, window_bounds = array<i64: 8, 1>}, {pipeline_mode = #tpu.pipeline_mode<synchronous>, transform_indices = @transform_1, window_bounds = array<i64: 128, 128>}, {transform_indices = @transform_2, window_bounds = array<i64: 8, 128>}]} {
    %c0 = arith.constant 0 : index
    %c0_0 = arith.constant 0 : index
    %0 = vector.load %arg1[%c0, %c0_0] : memref<8x1xi32, #tpu.memory_space<vmem>>, vector<8x1xi32>
    %cst = arith.constant 0.000000e+00 : f32
    %1 = vector.broadcast %cst : f32 to vector<8x128xf32>
    %c0_i32 = arith.constant 0 : i32
    %c128_i32 = arith.constant 128 : i32
    %2 = arith.muli %c0_i32, %c128_i32 : i32
    %3 = tpu.assume_multiple %2, 128 : i32
    %4 = arith.index_cast %3 : i32 to index
    %c0_1 = arith.constant 0 : index
    %5 = vector.load %arg2[%4, %c0_1] : memref<128x128xf32, #tpu.memory_space<vmem>>, vector<128x128xf32>
    %6 = tpu.iota {dimensions = array<i32: 1>} : vector<8x128xi32>
    %7 = vector.broadcast %3 : i32 to vector<8x128xi32>
    %8 = arith.addi %6, %7 : vector<8x128xi32>
    %9 = vector.broadcast %0 : vector<8x1xi32> to vector<8x128xi32>
    %10 = arith.cmpi eq, %8, %9 : vector<8x128xi32>
    %11 = arith.extui %10 : vector<8x128xi1> to vector<8x128xi32>
    %12 = arith.sitofp %11 : vector<8x128xi32> to vector<8x128xf32>
    %cst_2 = arith.constant dense<0.000000e+00> : vector<8x128xf32>
    %13 = tpu.matmul %12, %5, %cst_2 {dimension_numbers = #tpu.dot_dimension_numbers<[1], [0], [0], [1], [0, 0, 1, 1], [], []>, precision = #tpu.contract_precision<fp32>} : vector<8x128xf32>, vector<128x128xf32>, vector<8x128xf32> -> vector<8x128xf32>
    %14 = arith.addf %1, %13 : vector<8x128xf32>
    %c1_i32 = arith.constant 1 : i32
    %c0_3 = arith.constant 0 : index
    %c0_4 = arith.constant 0 : index
    %15 = vector.load %arg3[%c0_3, %c0_4] : memref<8x128xf32, #tpu.memory_space<vmem>>, vector<8x128xf32>
    tpu.vector_store %arg3[%c0_3, %c0_4], %14 {strides = array<i32>} : memref<8x128xf32, #tpu.memory_space<vmem>>, vector<8x128xf32>,
    return
  }
  func.func @transform_0(%arg0: i32) -> (i32, i32) {
    %c0_i32 = arith.constant 0 : i32
    %c0_i32_0 = arith.constant 0 : i32
    return %arg0, %c0_i32 : i32, i32
  }
  func.func @transform_1(%arg0: i32) -> (i32, i32) {
    %c0_i32 = arith.constant 0 : i32
    %c0_i32_0 = arith.constant 0 : i32
    %c0_i32_1 = arith.constant 0 : i32
    return %c0_i32, %c0_i32_0 : i32, i32
  }
  func.func @transform_2(%arg0: i32) -> (i32, i32) {
    %c0_i32 = arith.constant 0 : i32
    %c0_i32_0 = arith.constant 0 : i32
    return %arg0, %c0_i32 : i32, i32
  }
}

</mosaic_0001>

<llo_original>
// kernel: tpu_custom_call.1
$region0: #{tpu_custom_call.1}
  #allocation0 [shape = 'u32[]', space=smem, size = 0x4, offset = 0x4, fixed_abs, tag = 'smem constant byte address 0x4 - core index']
  #allocation1 [shape = 'u32[144,128]{1,0:T(1,128)}', space=vmem, size = 0x12000, scoped, tag = 'internal scratch']
  %s0 = inlined_call_operand.vmem [shape: s32[16,1], index: 0, kind: input, shape index: {}]
  %s1 = inlined_call_operand.hbm [shape: f32[128,128], index: 1, kind: input, shape index: {}]
  %s2 = inlined_call_operand.hbm [shape: f32[16,128], index: 2, kind: output, shape index: {}]
  %s3 = sld [smem:[#allocation0]]
  $region45: #{tpu_custom_call.1} parent=0
    _
  %s5 = ssub.s32 1, %s3
  %s6 = scalar_select 0, %s5, %s3
  $region1: #{tpu_custom_call.1} parent=0
    #allocation2 [shape = 'u8[65536]{0}', space=vmem, size = 0x10000, scoped, tag = 'input window, operand 1, single buffered']
    #allocation3 [shape = 's32[2]{0}', space=sflag, size = 0x8, scoped, tag = 'scoped memory for tpu_custom_call.1']
    #allocation4 [shape = 's32[2]{0}', space=sflag, size = 0x8, scoped, tag = 'scoped memory for tpu_custom_call.1']
    #allocation5 [shape = 'u8[8192]{0}', space=vmem, size = 0x2000, scoped, tag = 'output window, operand 0']
    %7 = vsyncpa [#allocation3], 0
    %8 = vsyncpa [#allocation4], 0
    %s9 = scalar_lea.sflag [#allocation4], 1
    %10 = vsyncpa %s9, 0
    loop: start=0, step=1, limit=4
    $region2: #{tpu_custom_call.1} parent=1 // loop_pre_header
      _
    $region3: #{tpu_custom_call.1} parent=1 // loop_header
      %s12 = sphi 0, %s16
      %p13 = scmp.ge.s32.totalorder %s12, 4
      %s22 = sphi 0, %s24
      %s25 = sphi 0, %s22
      %s26 = sphi 0, %s25
      %s42 = sphi 0, %s26
      %s46 = sphi 0, %s46
      %s48 = sphi 0, %s46
      %s49 = sphi 0, %s48
      %s63 = sphi 0, %s49
      %s69 = sphi 0, %s71
      %s72 = sphi 0, %s69
      %s73 = sphi 0, %s72
      %s89 = sphi 0, %s73
    $region4: #{tpu_custom_call.1} parent=1 // loop_header_branch
      %15 = sbr.rel (%p13) target = $region8
    $region5: #{tpu_custom_call.1} parent=1 // loop_body
      %s17 = ssub.s32 %s12, 1
      %s18 = ssub.s32 %s12, 2
      %s19 = sadd.s32 %s12, 1
      %s20 = ssub.s32 %s12, %s19
      %p21 = scmp.eq.s32.totalorder %s20, 0
      %s23 = sadd.s32 %s22, 1
      %s24 = scalar_select %p21, %s22, %s23
      %p27 = pneg %p21
      %p28 = scmp.eq.s32.totalorder %s12, 1
      %p29 = por %p27, %p28
      %p30 = scmp.ne.s32.totalorder %s22, %s25
      %p31 = scmp.eq.s32.totalorder %s12, 0
      %p32 = por %p30, %p31
      %p33 = scmp.ne.s32.totalorder %s22, %s25
      %p34 = scmp.eq.s32.totalorder %s17, 1
      %p35 = por %p33, %p34
      %p36 = scmp.ne.s32.totalorder %s25, %s26
      %p37 = scmp.eq.s32.totalorder %s17, 0
      %p38 = por %p36, %p37
      %p39 = scmp.ne.s32.totalorder %s25, %s26
      %p40 = scmp.eq.s32.totalorder %s18, 1
      %p41 = por %p39, %p40
      %p43 = scmp.ne.s32.totalorder %s26, %s42
      %p44 = scmp.eq.s32.totalorder %s18, 0
      %p45 = por %p43, %p44
      %s47 = sadd.s32 %s46, 1
      %p50 = scmp.eq.s32.totalorder %s12, 1
      %p51 = scmp.ne.s32.totalorder %s46, %s48
      %p52 = scmp.eq.s32.totalorder %s12, 0
      %p53 = por %p51, %p52
      %p54 = scmp.ne.s32.totalorder %s46, %s48
      %p55 = scmp.eq.s32.totalorder %s17, 1
      %p56 = por %p54, %p55
      %p57 = scmp.ne.s32.totalorder %s48, %s49
      %p58 = scmp.eq.s32.totalorder %s17, 0
      %p59 = por %p57, %p58
      %p60 = scmp.ne.s32.totalorder %s48, %s49
      %p61 = scmp.eq.s32.totalorder %s18, 1
      %p62 = por %p60, %p61
      %p64 = scmp.ne.s32.totalorder %s49, %s63
      %p65 = scmp.eq.s32.totalorder %s18, 0
      %p66 = por %p64, %p65
      %s67 = ssub.s32 %s12, %s19
      %p68 = scmp.eq.s32.totalorder %s67, 0
      %s70 = sadd.s32 %s69, 1
      %s71 = scalar_select %p68, %s69, %s70
      %p74 = pneg %p68
      %p75 = scmp.eq.s32.totalorder %s12, 1
      %p76 = por %p74, %p75
      %p77 = scmp.ne.s32.totalorder %s69, %s72
      %p78 = scmp.eq.s32.totalorder %s12, 0
      %p79 = por %p77, %p78
      %p80 = scmp.ne.s32.totalorder %s69, %s72
      %p81 = scmp.eq.s32.totalorder %s17, 1
      %p82 = por %p80, %p81
      %p83 = scmp.ne.s32.totalorder %s72, %s73
      %p84 = scmp.eq.s32.totalorder %s17, 0
      %p85 = por %p83, %p84
      %p86 = scmp.ne.s32.totalorder %s72, %s73
      %p87 = scmp.eq.s32.totalorder %s18, 1
      %p88 = por %p86, %p87
      %p90 = scmp.ne.s32.totalorder %s73, %s89
      %p91 = scmp.eq.s32.totalorder %s18, 0
      %p92 = por %p90, %p91
      %p93 = scmp.le.s32.totalorder 1, %s12
      %p94 = scmp.lt.s32.totalorder %s12, 3
      %p95 = pnand %p93, %p94
      %p96 = pneg %p95
      // Predicated region
      $region9: #{tpu_custom_call.1} parent=5 // pred_check
        _
      $region10: #{tpu_custom_call.1} parent=5 // pred_check_branch
        %98 = sbr.rel (%p95) target = $region12
      $region11: #{tpu_custom_call.1} parent=5 // pred_region
        %s99 = ssub.s32 %s12, 1
        // Predicated region
        $region13: #{tpu_custom_call.1} parent=11 // pred_check
          %p100 = pneg %p59
        $region14: #{tpu_custom_call.1} parent=11 // pred_check_branch
          %102 = sbr.rel (%p100) target = $region16
        $region15: #{tpu_custom_call.1} parent=11 // pred_region
          %s104 = ssub.s32 2048, 2048
          %105 = vsyncadd [#allocation3], %s104
          %s106 = sshll.u32 [#allocation2], 4
          %s107 = int_to_ptr.vmem [resolvable:$true] %s106
          %112 = dma.hbm_to_vmem [thread:$0]  %s1, 2048, %s107, [#allocation3], 128, 128, 8
        $region16: #{tpu_custom_call.1} parent=11 // pred_fallthru
          _
      $region12: #{tpu_custom_call.1} parent=5 // pred_fallthru
        _
      %p113 = scmp.lt.s32.totalorder %s12, 2
      // Predicated region
      $region17: #{tpu_custom_call.1} parent=5 // pred_check
        %p114 = pneg %p113
      $region18: #{tpu_custom_call.1} parent=5 // pred_check_branch
        %116 = sbr.rel (%p114) target = $region20
      $region19: #{tpu_custom_call.1} parent=5 // pred_region
        // Predicated region
        $region21: #{tpu_custom_call.1} parent=19 // pred_check
          %p117 = pneg %p32
        $region22: #{tpu_custom_call.1} parent=19 // pred_check_branch
          %119 = sbr.rel (%p117) target = $region24
        $region23: #{tpu_custom_call.1} parent=19 // pred_region
          %p120 = scmp.lt.s32.totalorder %s12, 1
          %s121 = scalar_select %p120, %s12, 1
          %s122 = smul.addr %s121, 8
          %s123 = scalar_lea.vmem %s0, %s122
        $region24: #{tpu_custom_call.1} parent=19 // pred_fallthru
          _
      $region20: #{tpu_custom_call.1} parent=5 // pred_fallthru
        _
      %p124 = scmp.le.s32.totalorder 1, %s12
      %p125 = scmp.lt.s32.totalorder %s12, 3
      %p126 = pnand %p124, %p125
      %p127 = pneg %p126
      // Predicated region
      $region25: #{tpu_custom_call.1} parent=5 // pred_check
        _
      $region26: #{tpu_custom_call.1} parent=5 // pred_check_branch
        %129 = sbr.rel (%p126) target = $region28
      $region27: #{tpu_custom_call.1} parent=5 // pred_region
        %s130 = ssub.s32 %s12, 1
        // Predicated region
        $region29: #{tpu_custom_call.1} parent=27 // pred_check
          %p131 = pneg %p59
        $region30: #{tpu_custom_call.1} parent=27 // pred_check_branch
          %133 = sbr.rel (%p131) target = $region32
        $region31: #{tpu_custom_call.1} parent=27 // pred_region
          %134 = dma.done [#allocation3], 2048
        $region32: #{tpu_custom_call.1} parent=27 // pred_fallthru
          _
        %p135 = scmp.lt.s32.totalorder %s17, 1
        %s136 = scalar_select %p135, %s17, 1
        %s137 = smul.addr %s136, 8
        %s138 = scalar_lea.vmem %s0, %s137
        %p139 = pneg %p38
        %p140 = pneg %p35
        %p141 = pneg %p59
        %p142 = pneg %p56
        %p143 = pneg %p85
        %p144 = pneg %p82
        %s145 = sand.u32 %s72, 1
        %s146 = scalar_lea.sflag [#allocation4], %s145
        %s147 = sand.u32 %s72, 1
        %s148 = smul.addr %s147, 8
        %s149 = scalar_lea.vmem [#allocation5], %s148
        %p150 = scmp.lt.s32.totalorder %s17, 1
        %s151 = scalar_select %p150, %s17, 1
        %s152 = smul.addr %s151, 8
        %s153 = scalar_lea.vmem %s0, %s152
        %v154 = vld [vmem:[%s153] sm:$0xff]
        %v155 = vld [vmem:[#allocation2] sm:$0xff]
        %v156 = vld [vmem:[#allocation2 + $0x8] sm:$0xff]
        %v157 = vld [vmem:[#allocation2 + $0x10] sm:$0xff]
        %v158 = vld [vmem:[#allocation2 + $0x18] sm:$0xff]
        %v159 = vld [vmem:[#allocation2 + $0x20] sm:$0xff]
        %v160 = vld [vmem:[#allocation2 + $0x28] sm:$0xff]
        %v161 = vld [vmem:[#allocation2 + $0x30] sm:$0xff]
        %v162 = vld [vmem:[#allocation2 + $0x38] sm:$0xff]
        %v163 = vld [vmem:[#allocation2 + $0x40] sm:$0xff]
        %v164 = vld [vmem:[#allocation2 + $0x48] sm:$0xff]
        %v165 = vld [vmem:[#allocation2 + $0x50] sm:$0xff]
        %v166 = vld [vmem:[#allocation2 + $0x58] sm:$0xff]
        %v167 = vld [vmem:[#allocation2 + $0x60] sm:$0xff]
        %v168 = vld [vmem:[#allocation2 + $0x68] sm:$0xff]
        %v169 = vld [vmem:[#allocation2 + $0x70] sm:$0xff]
        %v170 = vld [vmem:[#allocation2 + $0x78] sm:$0xff]
        %v171 = vlaneseq
        %v172 = vand.u32 %v171, 127
        %v173 = vstv 0
        %v174 = vadd.s32 %v172, %v173
        %175 = vset.pattern.permute.xlu0 0
        %176 = vperm.xlu0 %175, %v154
        %v177 = vpop.permute.xlu0 %176
        %vm178 = vcmp.eq.s32.totalorder %v174, %v177
        %v179 = vsel %vm178, 1, 0
        %v180 = vcvt.s32.f32 %v179
        %181 = vmatprep.subr.mxu0 0.0
        %v182 = vand.u32 %v170, 4294901760
        %183 = vmatpush1.msra.mxu0 %v182
        %184 = vmatprep.subr.mxu0 0.0
        %v185 = vand.u32 %v169, 4294901760
        %186 = vmatpush1.msra.mxu0 %v185
        %187 = vmatprep.subr.mxu0 0.0
        %v188 = vand.u32 %v168, 4294901760
        %189 = vmatpush1.msra.mxu0 %v188
        %190 = vmatprep.subr.mxu0 0.0
        %v191 = vand.u32 %v167, 4294901760
        %192 = vmatpush1.msra.mxu0 %v191
        %193 = vmatprep.subr.mxu0 0.0
        %v194 = vand.u32 %v166, 4294901760
        %195 = vmatpush1.msra.mxu0 %v194
        %196 = vmatprep.subr.mxu0 0.0
        %v197 = vand.u32 %v165, 4294901760
        %198 = vmatpush1.msra.mxu0 %v197
        %199 = vmatprep.subr.mxu0 0.0
        %v200 = vand.u32 %v164, 4294901760
        %201 = vmatpush1.msra.mxu0 %v200
        %202 = vmatprep.subr.mxu0 0.0
        %v203 = vand.u32 %v163, 4294901760
        %204 = vmatpush1.msra.mxu0 %v203
        %205 = vmatprep.subr.mxu0 0.0
        %v206 = vand.u32 %v162, 4294901760
        %207 = vmatpush1.msra.mxu0 %v206
        %208 = vmatprep.subr.mxu0 0.0
        %v209 = vand.u32 %v161, 4294901760
        %210 = vmatpush1.msra.mxu0 %v209
        %211 = vmatprep.subr.mxu0 0.0
        %v212 = vand.u32 %v160, 4294901760
        %213 = vmatpush1.msra.mxu0 %v212
        %214 = vmatprep.subr.mxu0 0.0
        %v215 = vand.u32 %v159, 4294901760
        %216 = vmatpush1.msra.mxu0 %v215
        %217 = vmatprep.subr.mxu0 0.0
        %v218 = vand.u32 %v158, 4294901760
        %219 = vmatpush1.msra.mxu0 %v218
        %220 = vmatprep.subr.mxu0 0.0
        %v221 = vand.u32 %v157, 4294901760
        %222 = vmatpush1.msra.mxu0 %v221
        %223 = vmatprep.subr.mxu0 0.0
        %v224 = vand.u32 %v156, 4294901760
        %225 = vmatpush1.msra.mxu0 %v224
        %226 = vmatprep.subr.mxu0 0.0
        %v227 = vand.u32 %v155, 4294901760
        %228 = vmatpush1.msra.mxu0 %v227
        %229 = vmatprep.subr.mxu0 0.0
        %230 = vmatpush2.msra.mxu0 0.0
        %231 = vmatprep.subr.mxu0 0.0
        %232 = vmatpush2.msra.mxu0 0.0
        %233 = vmatprep.subr.mxu0 0.0
        %234 = vmatpush2.msra.mxu0 0.0
        %235 = vmatprep.subr.mxu0 0.0
        %236 = vmatpush2.msra.mxu0 0.0
        %237 = vmatprep.subr.mxu0 0.0
        %238 = vmatpush2.msra.mxu0 0.0
        %239 = vmatprep.subr.mxu0 0.0
        %240 = vmatpush2.msra.mxu0 0.0
        %241 = vmatprep.subr.mxu0 0.0
        %242 = vmatpush2.msra.mxu0 0.0
        %243 = vmatprep.subr.mxu0 0.0
        %244 = vmatpush2.msra.mxu0 0.0
        %245 = vmatprep.subr.mxu0 0.0
        %246 = vmatpush2.msra.mxu0 0.0
        %247 = vmatprep.subr.mxu0 0.0
        %248 = vmatpush2.msra.mxu0 0.0
        %249 = vmatprep.subr.mxu0 0.0
        %250 = vmatpush2.msra.mxu0 0.0
        %251 = vmatprep.subr.mxu0 0.0
        %252 = vmatpush2.msra.mxu0 0.0
        %253 = vmatprep.subr.mxu0 0.0
        %254 = vmatpush2.msra.mxu0 0.0
        %255 = vmatprep.subr.mxu0 0.0
        %256 = vmatpush2.msra.mxu0 0.0
        %257 = vmatprep.subr.mxu0 0.0
        %258 = vmatpush2.msra.mxu0 0.0
        %259 = vmatprep.subr.mxu0 0.0
        %260 = vmatpush2.msra.mxu0 0.0
        %261 = vmatprep.mubr.f32.mxu0 0.0
        %v262 = vand.u32 %v180, 4294901760
        %v263 = vsub.f32 %v180, %v262
        %v264 = vand.u32 %v263, 4294901760
        %v265 = vsub.f32 %v263, %v264
        %v266 = vand.u32 %v265, 4294901760
        %267 = vmatmul.mubr.f32.gmra.mxu0 %v266
        %v268 = vpop.f32.mrf.mxu0
        %v269 = vadd.f32 0.0, %v268
        %v270 = vpop.f32.mrf.mxu0
        %271 = vdwg.mxu0
        %272 = vmatprep.subr.mxu0 0.0
        %v273 = vand.u32 %v170, 4294901760
        %v274 = vsub.f32 %v170, %v273
        %v275 = vand.u32 %v274, 4294901760
        %v276 = vsub.f32 %v274, %v275
        %v277 = vand.u32 %v276, 4294901760
        %278 = vmatpush1.msra.mxu0 %v277
        %279 = vmatprep.subr.mxu0 0.0
        %v280 = vand.u32 %v169, 4294901760
        %v281 = vsub.f32 %v169, %v280
        %v282 = vand.u32 %v281, 4294901760
        %v283 = vsub.f32 %v281, %v282
        %v284 = vand.u32 %v283, 4294901760
        %285 = vmatpush1.msra.mxu0 %v284
        %286 = vmatprep.subr.mxu0 0.0
        %v287 = vand.u32 %v168, 4294901760
        %v288 = vsub.f32 %v168, %v287
        %v289 = vand.u32 %v288, 4294901760
        %v290 = vsub.f32 %v288, %v289
        %v291 = vand.u32 %v290, 4294901760
        %292 = vmatpush1.msra.mxu0 %v291
        %293 = vmatprep.subr.mxu0 0.0
        %v294 = vand.u32 %v167, 4294901760
        %v295 = vsub.f32 %v167, %v294
        %v296 = vand.u32 %v295, 4294901760
        %v297 = vsub.f32 %v295, %v296
        %v298 = vand.u32 %v297, 4294901760
        %299 = vmatpush1.msra.mxu0 %v298
        %300 = vmatprep.subr.mxu0 0.0
        %v301 = vand.u32 %v166, 4294901760
        %v302 = vsub.f32 %v166, %v301
        %v303 = vand.u32 %v302, 4294901760
        %v304 = vsub.f32 %v302, %v303
        %v305 = vand.u32 %v304, 4294901760
        %306 = vmatpush1.msra.mxu0 %v305
        %307 = vmatprep.subr.mxu0 0.0
        %v308 = vand.u32 %v165, 4294901760
        %v309 = vsub.f32 %v165, %v308
        %v310 = vand.u32 %v309, 4294901760
        %v311 = vsub.f32 %v309, %v310
        %v312 = vand.u32 %v311, 4294901760
        %313 = vmatpush1.msra.mxu0 %v312
        %314 = vmatprep.subr.mxu0 0.0
        %v315 = vand.u32 %v164, 4294901760
        %v316 = vsub.f32 %v164, %v315
        %v317 = vand.u32 %v316, 4294901760
        %v318 = vsub.f32 %v316, %v317
        %v319 = vand.u32 %v318, 4294901760
        %320 = vmatpush1.msra.mxu0 %v319
        %321 = vmatprep.subr.mxu0 0.0
        %v322 = vand.u32 %v163, 4294901760
        %v323 = vsub.f32 %v163, %v322
        %v324 = vand.u32 %v323, 4294901760
        %v325 = vsub.f32 %v323, %v324
        %v326 = vand.u32 %v325, 4294901760
        %327 = vmatpush1.msra.mxu0 %v326
        %328 = vmatprep.subr.mxu0 0.0
        %v329 = vand.u32 %v162, 4294901760
        %v330 = vsub.f32 %v162, %v329
        %v331 = vand.u32 %v330, 4294901760
        %v332 = vsub.f32 %v330, %v331
        %v333 = vand.u32 %v332, 4294901760
        %334 = vmatpush1.msra.mxu0 %v333
        %335 = vmatprep.subr.mxu0 0.0
        %v336 = vand.u32 %v161, 4294901760
        %v337 = vsub.f32 %v161, %v336
        %v338 = vand.u32 %v337, 4294901760
        %v339 = vsub.f32 %v337, %v338
        %v340 = vand.u32 %v339, 4294901760
        %341 = vmatpush1.msra.mxu0 %v340
        %342 = vmatprep.subr.mxu0 0.0
        %v343 = vand.u32 %v160, 4294901760
        %v344 = vsub.f32 %v160, %v343
        %v345 = vand.u32 %v344, 4294901760
        %v346 = vsub.f32 %v344, %v345
        %v347 = vand.u32 %v346, 4294901760
        %348 = vmatpush1.msra.mxu0 %v347
        %349 = vmatprep.subr.mxu0 0.0
        %v350 = vand.u32 %v159, 4294901760
        %v351 = vsub.f32 %v159, %v350
        %v352 = vand.u32 %v351, 4294901760
        %v353 = vsub.f32 %v351, %v352
        %v354 = vand.u32 %v353, 4294901760
        %355 = vmatpush1.msra.mxu0 %v354
        %356 = vmatprep.subr.mxu0 0.0
        %v357 = vand.u32 %v158, 4294901760
        %v358 = vsub.f32 %v158, %v357
        %v359 = vand.u32 %v358, 4294901760
        %v360 = vsub.f32 %v358, %v359
        %v361 = vand.u32 %v360, 4294901760
        %362 = vmatpush1.msra.mxu0 %v361
        %363 = vmatprep.subr.mxu0 0.0
        %v364 = vand.u32 %v157, 4294901760
        %v365 = vsub.f32 %v157, %v364
        %v366 = vand.u32 %v365, 4294901760
        %v367 = vsub.f32 %v365, %v366
        %v368 = vand.u32 %v367, 4294901760
        %369 = vmatpush1.msra.mxu0 %v368
        %370 = vmatprep.subr.mxu0 0.0
        %v371 = vand.u32 %v156, 4294901760
        %v372 = vsub.f32 %v156, %v371
        %v373 = vand.u32 %v372, 4294901760
        %v374 = vsub.f32 %v372, %v373
        %v375 = vand.u32 %v374, 4294901760
        %376 = vmatpush1.msra.mxu0 %v375
        %377 = vmatprep.subr.mxu0 0.0
        %v378 = vand.u32 %v155, 4294901760
        %v379 = vsub.f32 %v155, %v378
        %v380 = vand.u32 %v379, 4294901760
        %v381 = vsub.f32 %v379, %v380
        %v382 = vand.u32 %v381, 4294901760
        %383 = vmatpush1.msra.mxu0 %v382
        %384 = vmatprep.subr.mxu0 0.0
        %385 = vmatpush2.msra.mxu0 0.0
        %386 = vmatprep.subr.mxu0 0.0
        %387 = vmatpush2.msra.mxu0 0.0
        %388 = vmatprep.subr.mxu0 0.0
        %389 = vmatpush2.msra.mxu0 0.0
        %390 = vmatprep.subr.mxu0 0.0
        %391 = vmatpush2.msra.mxu0 0.0
        %392 = vmatprep.subr.mxu0 0.0
        %393 = vmatpush2.msra.mxu0 0.0
        %394 = vmatprep.subr.mxu0 0.0
        %395 = vmatpush2.msra.mxu0 0.0
        %396 = vmatprep.subr.mxu0 0.0
        %397 = vmatpush2.msra.mxu0 0.0
        %398 = vmatprep.subr.mxu0 0.0
        %399 = vmatpush2.msra.mxu0 0.0
        %400 = vmatprep.subr.mxu0 0.0
        %401 = vmatpush2.msra.mxu0 0.0
        %402 = vmatprep.subr.mxu0 0.0
        %403 = vmatpush2.msra.mxu0 0.0
        %404 = vmatprep.subr.mxu0 0.0
        %405 = vmatpush2.msra.mxu0 0.0
        %406 = vmatprep.subr.mxu0 0.0
        %407 = vmatpush2.msra.mxu0 0.0
        %408 = vmatprep.subr.mxu0 0.0
        %409 = vmatpush2.msra.mxu0 0.0
        %410 = vmatprep.subr.mxu0 0.0
        %411 = vmatpush2.msra.mxu0 0.0
        %412 = vmatprep.subr.mxu0 0.0
        %413 = vmatpush2.msra.mxu0 0.0
        %414 = vmatprep.subr.mxu0 0.0
        %415 = vmatpush2.msra.mxu0 0.0
        %416 = vmatprep.mubr.f32.mxu0 0.0
        %v417 = vand.u32 %v180, 4294901760
        %418 = vmatmul.mubr.f32.gmra.mxu0 %v417
        %v419 = vpop.f32.mrf.mxu0
        %v420 = vadd.f32 %v269, %v419
        %v421 = vpop.f32.mrf.mxu0
        %422 = vdwg.mxu0
        %423 = vmatprep.subr.mxu0 0.0
        %v424 = vand.u32 %v170, 4294901760
        %v425 = vsub.f32 %v170, %v424
        %426 = vmatpush1.msra.mxu0 %v425
        %427 = vmatprep.subr.mxu0 0.0
        %v428 = vand.u32 %v169, 4294901760
        %v429 = vsub.f32 %v169, %v428
        %430 = vmatpush1.msra.mxu0 %v429
        %431 = vmatprep.subr.mxu0 0.0
        %v432 = vand.u32 %v168, 4294901760
        %v433 = vsub.f32 %v168, %v432
        %434 = vmatpush1.msra.mxu0 %v433
        %435 = vmatprep.subr.mxu0 0.0
        %v436 = vand.u32 %v167, 4294901760
        %v437 = vsub.f32 %v167, %v436
        %438 = vmatpush1.msra.mxu0 %v437
        %439 = vmatprep.subr.mxu0 0.0
        %v440 = vand.u32 %v166, 4294901760
        %v441 = vsub.f32 %v166, %v440
        %442 = vmatpush1.msra.mxu0 %v441
        %443 = vmatprep.subr.mxu0 0.0
        %v444 = vand.u32 %v165, 4294901760
        %v445 = vsub.f32 %v165, %v444
        %446 = vmatpush1.msra.mxu0 %v445
        %447 = vmatprep.subr.mxu0 0.0
        %v448 = vand.u32 %v164, 4294901760
        %v449 = vsub.f32 %v164, %v448
        %450 = vmatpush1.msra.mxu0 %v449
        %451 = vmatprep.subr.mxu0 0.0
        %v452 = vand.u32 %v163, 4294901760
        %v453 = vsub.f32 %v163, %v452
        %454 = vmatpush1.msra.mxu0 %v453
        %455 = vmatprep.subr.mxu0 0.0
        %v456 = vand.u32 %v162, 4294901760
        %v457 = vsub.f32 %v162, %v456
        %458 = vmatpush1.msra.mxu0 %v457
        %459 = vmatprep.subr.mxu0 0.0
        %v460 = vand.u32 %v161, 4294901760
        %v461 = vsub.f32 %v161, %v460
        %462 = vmatpush1.msra.mxu0 %v461
        %463 = vmatprep.subr.mxu0 0.0
        %v464 = vand.u32 %v160, 4294901760
        %v465 = vsub.f32 %v160, %v464
        %466 = vmatpush1.msra.mxu0 %v465
        %467 = vmatprep.subr.mxu0 0.0
        %v468 = vand.u32 %v159, 4294901760
        %v469 = vsub.f32 %v159, %v468
        %470 = vmatpush1.msra.mxu0 %v469
        %471 = vmatprep.subr.mxu0 0.0
        %v472 = vand.u32 %v158, 4294901760
        %v473 = vsub.f32 %v158, %v472
        %474 = vmatpush1.msra.mxu0 %v473
        %475 = vmatprep.subr.mxu0 0.0
        %v476 = vand.u32 %v157, 4294901760
        %v477 = vsub.f32 %v157, %v476
        %478 = vmatpush1.msra.mxu0 %v477
        %479 = vmatprep.subr.mxu0 0.0
        %v480 = vand.u32 %v156, 4294901760
        %v481 = vsub.f32 %v156, %v480
        %482 = vmatpush1.msra.mxu0 %v481
        %483 = vmatprep.subr.mxu0 0.0
        %v484 = vand.u32 %v155, 4294901760
        %v485 = vsub.f32 %v155, %v484
        %486 = vmatpush1.msra.mxu0 %v485
        %487 = vmatprep.subr.mxu0 0.0
        %488 = vmatpush2.msra.mxu0 0.0
        %489 = vmatprep.subr.mxu0 0.0
        %490 = vmatpush2.msra.mxu0 0.0
        %491 = vmatprep.subr.mxu0 0.0
        %492 = vmatpush2.msra.mxu0 0.0
        %493 = vmatprep.subr.mxu0 0.0
        %494 = vmatpush2.msra.mxu0 0.0
        %495 = vmatprep.subr.mxu0 0.0
        %496 = vmatpush2.msra.mxu0 0.0
        %497 = vmatprep.subr.mxu0 0.0
        %498 = vmatpush2.msra.mxu0 0.0
        %499 = vmatprep.subr.mxu0 0.0
        %500 = vmatpush2.msra.mxu0 0.0
        %501 = vmatprep.subr.mxu0 0.0
        %502 = vmatpush2.msra.mxu0 0.0
        %503 = vmatprep.subr.mxu0 0.0
        %504 = vmatpush2.msra.mxu0 0.0
        %505 = vmatprep.subr.mxu0 0.0
        %506 = vmatpush2.msra.mxu0 0.0
        %507 = vmatprep.subr.mxu0 0.0
        %508 = vmatpush2.msra.mxu0 0.0
        %509 = vmatprep.subr.mxu0 0.0
        %510 = vmatpush2.msra.mxu0 0.0
        %511 = vmatprep.subr.mxu0 0.0
        %512 = vmatpush2.msra.mxu0 0.0
        %513 = vmatprep.subr.mxu0 0.0
        %514 = vmatpush2.msra.mxu0 0.0
        %515 = vmatprep.subr.mxu0 0.0
        %516 = vmatpush2.msra.mxu0 0.0
        %517 = vmatprep.subr.mxu0 0.0
        %518 = vmatpush2.msra.mxu0 0.0
        %519 = vmatprep.mubr.f32.mxu0 0.0
        %v520 = vand.u32 %v180, 4294901760
        %v521 = vsub.f32 %v180, %v520
        %522 = vmatmul.mubr.f32.gmra.mxu0 %v521
        %v523 = vpop.f32.mrf.mxu0
        %v524 = vadd.f32 %v420, %v523
        %v525 = vpop.f32.mrf.mxu0
        %526 = vdwg.mxu0
        %527 = vmatprep.subr.mxu0 0.0
        %v528 = vand.u32 %v170, 4294901760
        %529 = vmatpush1.msra.mxu0 %v528
        %530 = vmatprep.subr.mxu0 0.0
        %v531 = vand.u32 %v169, 4294901760
        %532 = vmatpush1.msra.mxu0 %v531
        %533 = vmatprep.subr.mxu0 0.0
        %v534 = vand.u32 %v168, 4294901760
        %535 = vmatpush1.msra.mxu0 %v534
        %536 = vmatprep.subr.mxu0 0.0
        %v537 = vand.u32 %v167, 4294901760
        %538 = vmatpush1.msra.mxu0 %v537
        %539 = vmatprep.subr.mxu0 0.0
        %v540 = vand.u32 %v166, 4294901760
        %541 = vmatpush1.msra.mxu0 %v540
        %542 = vmatprep.subr.mxu0 0.0
        %v543 = vand.u32 %v165, 4294901760
        %544 = vmatpush1.msra.mxu0 %v543
        %545 = vmatprep.subr.mxu0 0.0
        %v546 = vand.u32 %v164, 4294901760
        %547 = vmatpush1.msra.mxu0 %v546
        %548 = vmatprep.subr.mxu0 0.0
        %v549 = vand.u32 %v163, 4294901760
        %550 = vmatpush1.msra.mxu0 %v549
        %551 = vmatprep.subr.mxu0 0.0
        %v552 = vand.u32 %v162, 4294901760
        %553 = vmatpush1.msra.mxu0 %v552
        %554 = vmatprep.subr.mxu0 0.0
        %v555 = vand.u32 %v161, 4294901760
        %556 = vmatpush1.msra.mxu0 %v555
        %557 = vmatprep.subr.mxu0 0.0
        %v558 = vand.u32 %v160, 4294901760
        %559 = vmatpush1.msra.mxu0 %v558
        %560 = vmatprep.subr.mxu0 0.0
        %v561 = vand.u32 %v159, 4294901760
        %562 = vmatpush1.msra.mxu0 %v561
        %563 = vmatprep.subr.mxu0 0.0
        %v564 = vand.u32 %v158, 4294901760
        %565 = vmatpush1.msra.mxu0 %v564
        %566 = vmatprep.subr.mxu0 0.0
        %v567 = vand.u32 %v157, 4294901760
        %568 = vmatpush1.msra.mxu0 %v567
        %569 = vmatprep.subr.mxu0 0.0
        %v570 = vand.u32 %v156, 4294901760
        %571 = vmatpush1.msra.mxu0 %v570
        %572 = vmatprep.subr.mxu0 0.0
        %v573 = vand.u32 %v155, 4294901760
        %574 = vmatpush1.msra.mxu0 %v573
        %575 = vmatprep.subr.mxu0 0.0
        %576 = vmatpush2.msra.mxu0 0.0
        %577 = vmatprep.subr.mxu0 0.0
        %578 = vmatpush2.msra.mxu0 0.0
        %579 = vmatprep.subr.mxu0 0.0
        %580 = vmatpush2.msra.mxu0 0.0
        %581 = vmatprep.subr.mxu0 0.0
        %582 = vmatpush2.msra.mxu0 0.0
        %583 = vmatprep.subr.mxu0 0.0
        %584 = vmatpush2.msra.mxu0 0.0
        %585 = vmatprep.subr.mxu0 0.0
        %586 = vmatpush2.msra.mxu0 0.0
        %587 = vmatprep.subr.mxu0 0.0
        %588 = vmatpush2.msra.mxu0 0.0
        %589 = vmatprep.subr.mxu0 0.0
        %590 = vmatpush2.msra.mxu0 0.0
        %591 = vmatprep.subr.mxu0 0.0
        %592 = vmatpush2.msra.mxu0 0.0
        %593 = vmatprep.subr.mxu0 0.0
        %594 = vmatpush2.msra.mxu0 0.0
        %595 = vmatprep.subr.mxu0 0.0
        %596 = vmatpush2.msra.mxu0 0.0
        %597 = vmatprep.subr.mxu0 0.0
        %598 = vmatpush2.msra.mxu0 0.0
        %599 = vmatprep.subr.mxu0 0.0
        %600 = vmatpush2.msra.mxu0 0.0
        %601 = vmatprep.subr.mxu0 0.0
        %602 = vmatpush2.msra.mxu0 0.0
        %603 = vmatprep.subr.mxu0 0.0
        %604 = vmatpush2.msra.mxu0 0.0
        %605 = vmatprep.subr.mxu0 0.0
        %606 = vmatpush2.msra.mxu0 0.0
        %607 = vmatprep.mubr.f32.mxu0 0.0
        %v608 = vand.u32 %v180, 4294901760
        %v609 = vsub.f32 %v180, %v608
        %v610 = vand.u32 %v609, 4294901760
        %611 = vmatmul.mubr.f32.gmra.mxu0 %v610
        %v612 = vpop.f32.mrf.mxu0
        %v613 = vadd.f32 %v524, %v612
        %v614 = vpop.f32.mrf.mxu0
        %615 = vdwg.mxu0
        %616 = vmatprep.subr.mxu0 0.0
        %v617 = vand.u32 %v170, 4294901760
        %v618 = vsub.f32 %v170, %v617
        %v619 = vand.u32 %v618, 4294901760
        %620 = vmatpush1.msra.mxu0 %v619
        %621 = vmatprep.subr.mxu0 0.0
        %v622 = vand.u32 %v169, 4294901760
        %v623 = vsub.f32 %v169, %v622
        %v624 = vand.u32 %v623, 4294901760
        %625 = vmatpush1.msra.mxu0 %v624
        %626 = vmatprep.subr.mxu0 0.0
        %v627 = vand.u32 %v168, 4294901760
        %v628 = vsub.f32 %v168, %v627
        %v629 = vand.u32 %v628, 4294901760
        %630 = vmatpush1.msra.mxu0 %v629
        %631 = vmatprep.subr.mxu0 0.0
        %v632 = vand.u32 %v167, 4294901760
        %v633 = vsub.f32 %v167, %v632
        %v634 = vand.u32 %v633, 4294901760
        %635 = vmatpush1.msra.mxu0 %v634
        %636 = vmatprep.subr.mxu0 0.0
        %v637 = vand.u32 %v166, 4294901760
        %v638 = vsub.f32 %v166, %v637
        %v639 = vand.u32 %v638, 4294901760
        %640 = vmatpush1.msra.mxu0 %v639
        %641 = vmatprep.subr.mxu0 0.0
        %v642 = vand.u32 %v165, 4294901760
        %v643 = vsub.f32 %v165, %v642
        %v644 = vand.u32 %v643, 4294901760
        %645 = vmatpush1.msra.mxu0 %v644
        %646 = vmatprep.subr.mxu0 0.0
        %v647 = vand.u32 %v164, 4294901760
        %v648 = vsub.f32 %v164, %v647
        %v649 = vand.u32 %v648, 4294901760
        %650 = vmatpush1.msra.mxu0 %v649
        %651 = vmatprep.subr.mxu0 0.0
        %v652 = vand.u32 %v163, 4294901760
        %v653 = vsub.f32 %v163, %v652
        %v654 = vand.u32 %v653, 4294901760
        %655 = vmatpush1.msra.mxu0 %v654
        %656 = vmatprep.subr.mxu0 0.0
        %v657 = vand.u32 %v162, 4294901760
        %v658 = vsub.f32 %v162, %v657
        %v659 = vand.u32 %v658, 4294901760
        %660 = vmatpush1.msra.mxu0 %v659
        %661 = vmatprep.subr.mxu0 0.0
        %v662 = vand.u32 %v161, 4294901760
        %v663 = vsub.f32 %v161, %v662
        %v664 = vand.u32 %v663, 4294901760
        %665 = vmatpush1.msra.mxu0 %v664
        %666 = vmatprep.subr.mxu0 0.0
        %v667 = vand.u32 %v160, 4294901760
        %v668 = vsub.f32 %v160, %v667
        %v669 = vand.u32 %v668, 4294901760
        %670 = vmatpush1.msra.mxu0 %v669
        %671 = vmatprep.subr.mxu0 0.0
        %v672 = vand.u32 %v159, 4294901760
        %v673 = vsub.f32 %v159, %v672
        %v674 = vand.u32 %v673, 4294901760
        %675 = vmatpush1.msra.mxu0 %v674
        %676 = vmatprep.subr.mxu0 0.0
        %v677 = vand.u32 %v158, 4294901760
        %v678 = vsub.f32 %v158, %v677
        %v679 = vand.u32 %v678, 4294901760
        %680 = vmatpush1.msra.mxu0 %v679
        %681 = vmatprep.subr.mxu0 0.0
        %v682 = vand.u32 %v157, 4294901760
        %v683 = vsub.f32 %v157, %v682
        %v684 = vand.u32 %v683, 4294901760
        %685 = vmatpush1.msra.mxu0 %v684
        %686 = vmatprep.subr.mxu0 0.0
        %v687 = vand.u32 %v156, 4294901760
        %v688 = vsub.f32 %v156, %v687
        %v689 = vand.u32 %v688, 4294901760
        %690 = vmatpush1.msra.mxu0 %v689
        %691 = vmatprep.subr.mxu0 0.0
        %v692 = vand.u32 %v155, 4294901760
        %v693 = vsub.f32 %v155, %v692
        %v694 = vand.u32 %v693, 4294901760
        %695 = vmatpush1.msra.mxu0 %v694
        %696 = vmatprep.subr.mxu0 0.0
        %697 = vmatpush2.msra.mxu0 0.0
        %698 = vmatprep.subr.mxu0 0.0
        %699 = vmatpush2.msra.mxu0 0.0
        %700 = vmatprep.subr.mxu0 0.0
        %701 = vmatpush2.msra.mxu0 0.0
        %702 = vmatprep.subr.mxu0 0.0
        %703 = vmatpush2.msra.mxu0 0.0
        %704 = vmatprep.subr.mxu0 0.0
        %705 = vmatpush2.msra.mxu0 0.0
        %706 = vmatprep.subr.mxu0 0.0
        %707 = vmatpush2.msra.mxu0 0.0
        %708 = vmatprep.subr.mxu0 0.0
        %709 = vmatpush2.msra.mxu0 0.0
        %710 = vmatprep.subr.mxu0 0.0
        %711 = vmatpush2.msra.mxu0 0.0
        %712 = vmatprep.subr.mxu0 0.0
        %713 = vmatpush2.msra.mxu0 0.0
        %714 = vmatprep.subr.mxu0 0.0
        %715 = vmatpush2.msra.mxu0 0.0
        %716 = vmatprep.subr.mxu0 0.0
        %717 = vmatpush2.msra.mxu0 0.0
        %718 = vmatprep.subr.mxu0 0.0
        %719 = vmatpush2.msra.mxu0 0.0
        %720 = vmatprep.subr.mxu0 0.0
        %721 = vmatpush2.msra.mxu0 0.0
        %722 = vmatprep.subr.mxu0 0.0
        %723 = vmatpush2.msra.mxu0 0.0
        %724 = vmatprep.subr.mxu0 0.0
        %725 = vmatpush2.msra.mxu0 0.0
        %726 = vmatprep.subr.mxu0 0.0
        %727 = vmatpush2.msra.mxu0 0.0
        %728 = vmatprep.mubr.f32.mxu0 0.0
        %v729 = vand.u32 %v180, 4294901760
        %730 = vmatmul.mubr.f32.gmra.mxu0 %v729
        %v731 = vpop.f32.mrf.mxu0
        %v732 = vadd.f32 %v613, %v731
        %v733 = vpop.f32.mrf.mxu0
        %734 = vdwg.mxu0
        %735 = vmatprep.subr.mxu0 0.0
        %v736 = vand.u32 %v170, 4294901760
        %737 = vmatpush1.msra.mxu0 %v736
        %738 = vmatprep.subr.mxu0 0.0
        %v739 = vand.u32 %v169, 4294901760
        %740 = vmatpush1.msra.mxu0 %v739
        %741 = vmatprep.subr.mxu0 0.0
        %v742 = vand.u32 %v168, 4294901760
        %743 = vmatpush1.msra.mxu0 %v742
        %744 = vmatprep.subr.mxu0 0.0
        %v745 = vand.u32 %v167, 4294901760
        %746 = vmatpush1.msra.mxu0 %v745
        %747 = vmatprep.subr.mxu0 0.0
        %v748 = vand.u32 %v166, 4294901760
        %749 = vmatpush1.msra.mxu0 %v748
        %750 = vmatprep.subr.mxu0 0.0
        %v751 = vand.u32 %v165, 4294901760
        %752 = vmatpush1.msra.mxu0 %v751
        %753 = vmatprep.subr.mxu0 0.0
        %v754 = vand.u32 %v164, 4294901760
        %755 = vmatpush1.msra.mxu0 %v754
        %756 = vmatprep.subr.mxu0 0.0
        %v757 = vand.u32 %v163, 4294901760
        %758 = vmatpush1.msra.mxu0 %v757
        %759 = vmatprep.subr.mxu0 0.0
        %v760 = vand.u32 %v162, 4294901760
        %761 = vmatpush1.msra.mxu0 %v760
        %762 = vmatprep.subr.mxu0 0.0
        %v763 = vand.u32 %v161, 4294901760
        %764 = vmatpush1.msra.mxu0 %v763
        %765 = vmatprep.subr.mxu0 0.0
        %v766 = vand.u32 %v160, 4294901760
        %767 = vmatpush1.msra.mxu0 %v766
        %768 = vmatprep.subr.mxu0 0.0
        %v769 = vand.u32 %v159, 4294901760
        %770 = vmatpush1.msra.mxu0 %v769
        %771 = vmatprep.subr.mxu0 0.0
        %v772 = vand.u32 %v158, 4294901760
        %773 = vmatpush1.msra.mxu0 %v772
        %774 = vmatprep.subr.mxu0 0.0
        %v775 = vand.u32 %v157, 4294901760
        %776 = vmatpush1.msra.mxu0 %v775
        %777 = vmatprep.subr.mxu0 0.0
        %v778 = vand.u32 %v156, 4294901760
        %779 = vmatpush1.msra.mxu0 %v778
        %780 = vmatprep.subr.mxu0 0.0
        %v781 = vand.u32 %v155, 4294901760
        %782 = vmatpush1.msra.mxu0 %v781
        %783 = vmatprep.subr.mxu0 0.0
        %784 = vmatpush2.msra.mxu0 0.0
        %785 = vmatprep.subr.mxu0 0.0
        %786 = vmatpush2.msra.mxu0 0.0
        %787 = vmatprep.subr.mxu0 0.0
        %788 = vmatpush2.msra.mxu0 0.0
        %789 = vmatprep.subr.mxu0 0.0
        %790 = vmatpush2.msra.mxu0 0.0
        %791 = vmatprep.subr.mxu0 0.0
        %792 = vmatpush2.msra.mxu0 0.0
        %793 = vmatprep.subr.mxu0 0.0
        %794 = vmatpush2.msra.mxu0 0.0
        %795 = vmatprep.subr.mxu0 0.0
        %796 = vmatpush2.msra.mxu0 0.0
        %797 = vmatprep.subr.mxu0 0.0
        %798 = vmatpush2.msra.mxu0 0.0
        %799 = vmatprep.subr.mxu0 0.0
        %800 = vmatpush2.msra.mxu0 0.0
        %801 = vmatprep.subr.mxu0 0.0
        %802 = vmatpush2.msra.mxu0 0.0
        %803 = vmatprep.subr.mxu0 0.0
        %804 = vmatpush2.msra.mxu0 0.0
        %805 = vmatprep.subr.mxu0 0.0
        %806 = vmatpush2.msra.mxu0 0.0
        %807 = vmatprep.subr.mxu0 0.0
        %808 = vmatpush2.msra.mxu0 0.0
        %809 = vmatprep.subr.mxu0 0.0
        %810 = vmatpush2.msra.mxu0 0.0
        %811 = vmatprep.subr.mxu0 0.0
        %812 = vmatpush2.msra.mxu0 0.0
        %813 = vmatprep.subr.mxu0 0.0
        %814 = vmatpush2.msra.mxu0 0.0
        %815 = vmatprep.mubr.f32.mxu0 0.0
        %v816 = vand.u32 %v180, 4294901760
        %817 = vmatmul.mubr.f32.gmra.mxu0 %v816
        %v818 = vpop.f32.mrf.mxu0
        %v819 = vadd.f32 %v732, %v818
        %v820 = vpop.f32.mrf.mxu0
        %821 = vdwg.mxu0
        %822 = vst [vmem:[%s149] sm:$0xff] %v819
        %s823 = sand.u32 %s72, 1
        %s824 = scalar_lea.sflag [#allocation4], %s823
        %s825 = sand.u32 %s72, 1
        %s826 = smul.addr %s825, 8
        %s827 = scalar_lea.vmem [#allocation5], %s826
        // Predicated region
        $region33: #{tpu_custom_call.1} parent=27 // pred_check
          %p828 = pneg %p82
        $region34: #{tpu_custom_call.1} parent=27 // pred_check_branch
          %830 = sbr.rel (%p828) target = $region36
        $region35: #{tpu_custom_call.1} parent=27 // pred_region
          %s832 = ssub.s32 128, 128
          %833 = vsyncadd %s824, %s832
          %s834 = smul.addr %s17, 128
          %s835 = scalar_lea.hbm %s2, %s834
          %s837 = sshll.u32 %s827, 4
          %s838 = int_to_ptr.vmem [resolvable:$true] %s837
          %840 = dma.vmem_to_hbm [thread:$0]  %s838, 128, %s835, %s824
        $region36: #{tpu_custom_call.1} parent=27 // pred_fallthru
          _
      $region28: #{tpu_custom_call.1} parent=5 // pred_fallthru
        _
      %p841 = scmp.le.s32.totalorder 2, %s12
      // Predicated region
      $region37: #{tpu_custom_call.1} parent=5 // pred_check
        %p842 = pneg %p841
      $region38: #{tpu_custom_call.1} parent=5 // pred_check_branch
        %844 = sbr.rel (%p842) target = $region40
      $region39: #{tpu_custom_call.1} parent=5 // pred_region
        %s845 = ssub.s32 %s12, 2
        // Predicated region
        $region41: #{tpu_custom_call.1} parent=39 // pred_check
          %p846 = pneg %p88
        $region42: #{tpu_custom_call.1} parent=39 // pred_check_branch
          %848 = sbr.rel (%p846) target = $region44
        $region43: #{tpu_custom_call.1} parent=39 // pred_region
          %s849 = sand.u32 %s73, 1
          %s850 = scalar_lea.sflag [#allocation4], %s849
          %s851 = sand.u32 %s73, 1
          %s852 = smul.addr %s851, 8
          %s853 = scalar_lea.vmem [#allocation5], %s852
          %854 = dma.done %s850, 128
        $region44: #{tpu_custom_call.1} parent=39 // pred_fallthru
          _
      $region40: #{tpu_custom_call.1} parent=5 // pred_fallthru
        _
    $region6: #{tpu_custom_call.1} parent=1 // loop_footer
      %s16 = sadd.s32 1, %s12
    $region7: #{tpu_custom_call.1} parent=1 // loop_footer_branch
      %11 = sbr.rel target = $region3
    $region8: #{tpu_custom_call.1} parent=1 // loop_exit
      _
    %855 = vsyncpa [#allocation3], 1
    %s856 = scalar_lea.sflag [#allocation3], 1
    %857 = vsyncpa %s856, 1
    %858 = vsyncpa [#allocation4], 1
    %s859 = scalar_lea.sflag [#allocation4], 1
    %860 = vsyncpa %s859, 1

</llo_original>
